<compile_context>
chip_gen: v5e
topology: v5e:2x2
jax: 0.10.0
libtpu: 0.0.40
codegen_flags: <defaults>
</compile_context>

<pallas_src>
import functools

import jax
import jax.numpy as jnp
from jax import lax
from jax.experimental import pallas as pl
from jax.experimental.pallas import tpu as pltpu

EPS = 1e-8
# Per-input block budget, sized by the f32 intermediate footprint (itemsize 4
# regardless of the input dtype): ~9 full-tile f32 temps + 2 inputs x 2
# pipeline buffers stays ~7 MiB at this setting.
_TARGET_BLOCK_BYTES = 512 * 1024


def _csd_partials_kernel(ys_ref, yt_ref, out_ref, *, hw, tile, num_classes,
                         num_t):
    """Per-(batch, HW-tile) partial statistics for the CSD loss.

    ys_ref / yt_ref : (C, T) logit tile (classes on sublanes, samples on lanes)
    out_ref         : (C, 6) f32 partials:
        [:,0]=Σa' [:,1]=Σb' [:,2]=Σa'² [:,3]=Σb'² [:,4]=Σa'b'   (per class,
        a' = softmax - 1/C shifted moments)
        [:,5]=Σ over valid lanes of per-sample Pearson corr (broadcast col)
    """
    C, T = ys_ref.shape
    inv_c = 1.0 / num_classes

    def softmax_cols(x):
        # Softmax along classes (sublane axis).  One Newton step on the EUP
        # approx reciprocal makes columns sum to 1 to ~f32 accuracy, which the
        # inter centering (a - 1/C) relies on.
        x = x - jnp.max(x, axis=0, keepdims=True)
        e = jnp.exp(x)
        s = jnp.sum(e, axis=0, keepdims=True)
        r = pl.reciprocal(s, approx=True)
        r = r * (2.0 - s * r)                      # Newton refine, (1,T) only
        return e * r

    def emit(mask):
        a = softmax_cols(ys_ref[...].astype(jnp.float32))
        b = softmax_cols(yt_ref[...].astype(jnp.float32))
        # Per-sample mean over classes of a softmax column is exactly 1/C, so
        # no cross-sublane mean reduction is needed for the inter centering.
        am = a - inv_c
        bm = b - inv_c
        if mask is not None:
            # Zeroed padded lanes contribute nothing to any statistic below
            # (their inter corr is 0 / eps = 0), and jnp.where also scrubs any
            # NaN coming from the garbage in the out-of-bounds input lanes.
            am = jnp.where(mask, am, 0.0)
            bm = jnp.where(mask, bm, 0.0)

        aa = am * am
        bb = bm * bm
        ab = am * bm

        # ---- inter: per-sample Pearson corr across classes (sublane reduces)
        num = jnp.sum(ab, axis=0, keepdims=True)   # (1, T)
        ssa = jnp.sum(aa, axis=0, keepdims=True)
        ssb = jnp.sum(bb, axis=0, keepdims=True)
        den = jnp.sqrt(ssa * ssb) + EPS
        corr = num * pl.reciprocal(den, approx=True)
        inter_sum = jnp.sum(corr)

        # ---- intra: per-class shifted moments over samples, on the MXU -----
        # (the kernel otherwise does zero matmul work, so the vector-extended
        #  slot is free; this unloads the XLU lane reductions.)
        ones_col = jnp.ones((T, 1), jnp.float32)

        def rowsum(x):
            return jnp.dot(x, ones_col, preferred_element_type=jnp.float32)

        stats = jnp.concatenate(
            [rowsum(am), rowsum(bm), rowsum(aa), rowsum(bb), rowsum(ab),
             jnp.broadcast_to(inter_sum, (C, 1)).astype(jnp.float32)],
            axis=1)
        out_ref[...] = stats                       # single store

    rem = hw - (num_t - 1) * tile                  # static: valid lanes, last tile
    if rem == tile:
        # HW divides the tile: remainder masking compiled out entirely.
        emit(None)
    else:
        is_last = pl.program_id(1) == (num_t - 1)

        @pl.when(is_last)
        def _():
            lane = lax.broadcasted_iota(jnp.int32, (C, T), 1)
            emit(lane < rem)

        @pl.when(jnp.logical_not(is_last))
        def _():
            emit(None)


def _pick_tile(hw, c):
    """Lane-tile length: multiple of 128, sized by the f32 temp footprint."""
    hw_pad = ((hw + 127) // 128) * 128
    target = max(128, (_TARGET_BLOCK_BYTES // max(1, 4 * c)) // 128 * 128)
    return min(target, hw_pad)


def csd_loss(Ys, Yt):
    """Pallas implementation of CSD.forward(Ys, Yt)."""
    assert Ys.ndim in (2, 4)
    assert Ys.shape == Yt.shape

    if Ys.ndim == 4:
        n, c, h, w = Ys.shape
        ys3 = Ys.reshape(n, c, h * w)              # free reshape — no transpose
        yt3 = Yt.reshape(n, c, h * w)
    else:
        # 2-D (samples, classes) inputs are small: one transpose to the
        # lane-dense (classes, samples) layout.
        m, c = Ys.shape
        ys3 = jnp.transpose(Ys).reshape(1, c, m)
        yt3 = jnp.transpose(Yt).reshape(1, c, m)

    N, C, HW = ys3.shape
    M = N * HW                                     # total valid sample count
    T = _pick_tile(HW, C)
    num_t = pl.cdiv(HW, T)

    kernel = functools.partial(
        _csd_partials_kernel, hw=HW, tile=T, num_classes=C, num_t=num_t)

    partials = pl.pallas_call(
        kernel,
        out_shape=jax.ShapeDtypeStruct((N, num_t, C, 6), jnp.float32),
        grid=(N, num_t),
        in_specs=[
            pl.BlockSpec((None, C, T), lambda bi, ti: (bi, 0, ti)),
            pl.BlockSpec((None, C, T), lambda bi, ti: (bi, 0, ti)),
        ],
        out_specs=pl.BlockSpec((None, None, C, 6), lambda bi, ti: (bi, ti, 0, 0)),
        compiler_params=pltpu.CompilerParams(
            # Both grid axes are independent -> megacore / v7x core split.
            dimension_semantics=("parallel", "parallel"),
            vmem_limit_bytes=32 * 1024 * 1024,
        ),
    )(ys3, yt3)

    # ---- tiny scalar combine in plain JAX (negligible work) ----------------
    mf = float(M)
    moments = jnp.sum(partials[..., :5], axis=(0, 1))        # (C, 5) f32
    sa, sb, saa, sbb, sab = (moments[:, i] for i in range(5))
    inter_sum = jnp.sum(partials[:, :, 0, 5])

    inter_loss = 1.0 - inter_sum / mf

    # Per-class Pearson corr over all samples.  Moments are accumulated on the
    # 1/C-shifted values (shift-invariant for covariance/variance), which keeps
    # them centered near zero and avoids catastrophic cancellation; the clamp
    # only guards residual f32 rounding.
    cov = sab - sa * sb / mf
    va = jnp.maximum(saa - sa * sa / mf, 0.0)
    vb = jnp.maximum(sbb - sb * sb / mf, 0.0)
    den = jnp.sqrt(va) * jnp.sqrt(vb) + EPS
    intra_loss = 1.0 - jnp.mean(cov / den)

    return inter_loss + intra_loss


def _csd_reference(Ys, Yt):
    """Pure-JAX reference that follows the PyTorch code literally."""
    if Ys.ndim == 4:
        c = Ys.shape[1]
        Ys = jnp.transpose(Ys, (0, 3, 2, 1)).reshape(-1, c)
        Yt = jnp.transpose(Yt, (0, 3, 2, 1)).reshape(-1, c)
    Ys = jax.nn.softmax(Ys.astype(jnp.float32), axis=1)
    Yt = jax.nn.softmax(Yt.astype(jnp.float32), axis=1)

    def pcl_mean(ss, ts):
        sc = ss - ss.mean(axis=1, keepdims=True)
        tc = ts - ts.mean(axis=1, keepdims=True)
        num = (sc * tc).sum(axis=1)
        den = jnp.linalg.norm(sc, axis=1) * jnp.linalg.norm(tc, axis=1) + EPS
        return (num / den).mean()

    inter = 1.0 - pcl_mean(Ys, Yt)
    intra = 1.0 - pcl_mean(Ys.T, Yt.T)
    return inter + intra


if __name__ == "__main__":
    key = jax.random.PRNGKey(0)
    k1, k2, k3, k4 = jax.random.split(key, 4)

    # 4-D segmentation-style input (N, C, H, W) — exercises the unmasked path.
    Ys4 = jax.random.normal(k1, (2, 4, 16, 16), dtype=jnp.float32)
    Yt4 = jax.random.normal(k2, (2, 4, 16, 16), dtype=jnp.float32)
    loss4 = csd_loss(Ys4, Yt4)
    jax.block_until_ready(loss4)
    ref4 = _csd_reference(Ys4, Yt4)

    # 2-D (samples, classes) input — exercises the gated last-tile masking.
    Ys2 = jax.random.normal(k3, (96, 8), dtype=jnp.float32)
    Yt2 = jax.random.normal(k4, (96, 8), dtype=jnp.float32)
    loss2 = csd_loss(Ys2, Yt2)
    jax.block_until_ready(loss2)
    ref2 = _csd_reference(Ys2, Yt2)

    assert jnp.allclose(loss4, ref4, rtol=2e-2, atol=2e-2), (loss4, ref4)
    assert jnp.allclose(loss2, ref2, rtol=2e-2, atol=2e-2), (loss2, ref2)
    print("KERNEL_OK")
</pallas_src>

<mosaic_0001>
module attributes {stable_mosaic.version = 11 : i64} {
  func.func @_csd_partials_kernel(%arg0: i32, %arg1: i32, %arg2: memref<1x4x256xf32, #tpu.memory_space<vmem>>, %arg3: memref<1x4x256xf32, #tpu.memory_space<vmem>>, %arg4: memref<1x1x4x6xf32, #tpu.memory_space<vmem>>) attributes {dimension_semantics = [#tpu.dimension_semantics<parallel>, #tpu.dimension_semantics<parallel>], iteration_bounds = array<i64: 2, 1>, scalar_prefetch = 0 : i64, scratch_operands = 0 : i64, tpu.core_type = #tpu.core_type<tc>, window_params = [{transform_indices = @transform_0, window_bounds = array<i64: 1, 4, 256>}, {transform_indices = @transform_1, window_bounds = array<i64: 1, 4, 256>}, {transform_indices = @transform_2, window_bounds = array<i64: 1, 1, 4, 6>}]} {
    %c0 = arith.constant 0 : index
    %c0_0 = arith.constant 0 : index
    %c0_1 = arith.constant 0 : index
    %0 = vector.load %arg2[%c0, %c0_0, %c0_1] : memref<1x4x256xf32, #tpu.memory_space<vmem>>, vector<1x4x256xf32>
    %1 = vector.shape_cast %0 : vector<1x4x256xf32> to vector<4x256xf32>
    %cst = arith.constant dense<0xFF800000> : vector<256xf32>
    %2 = vector.multi_reduction <maximumf>, %1, %cst [0] : vector<4x256xf32> to vector<256xf32>
    %3 = vector.shape_cast %2 : vector<256xf32> to vector<1x256xf32>
    %4 = vector.broadcast %3 : vector<1x256xf32> to vector<4x256xf32>
    %5 = arith.subf %1, %4 : vector<4x256xf32>
    %6 = math.exp %5 : vector<4x256xf32>
    %cst_2 = arith.constant dense<0.000000e+00> : vector<256xf32>
    %7 = vector.multi_reduction <add>, %6, %cst_2 [0] : vector<4x256xf32> to vector<256xf32>
    %8 = vector.shape_cast %7 : vector<256xf32> to vector<1x256xf32>
    %9 = tpu.reciprocal %8 {approx = true} : vector<1x256xf32> -> vector<1x256xf32>
    %10 = arith.mulf %8, %9 : vector<1x256xf32>
    %cst_3 = arith.constant 2.000000e+00 : f32
    %11 = vector.broadcast %cst_3 : f32 to vector<1x256xf32>
    %12 = arith.subf %11, %10 : vector<1x256xf32>
    %13 = arith.mulf %9, %12 : vector<1x256xf32>
    %14 = vector.broadcast %13 : vector<1x256xf32> to vector<4x256xf32>
    %15 = arith.mulf %6, %14 : vector<4x256xf32>
    %c0_4 = arith.constant 0 : index
    %c0_5 = arith.constant 0 : index
    %c0_6 = arith.constant 0 : index
    %16 = vector.load %arg3[%c0_4, %c0_5, %c0_6] : memref<1x4x256xf32, #tpu.memory_space<vmem>>, vector<1x4x256xf32>
    %17 = vector.shape_cast %16 : vector<1x4x256xf32> to vector<4x256xf32>
    %cst_7 = arith.constant dense<0xFF800000> : vector<256xf32>
    %18 = vector.multi_reduction <maximumf>, %17, %cst_7 [0] : vector<4x256xf32> to vector<256xf32>
    %19 = vector.shape_cast %18 : vector<256xf32> to vector<1x256xf32>
    %20 = vector.broadcast %19 : vector<1x256xf32> to vector<4x256xf32>
    %21 = arith.subf %17, %20 : vector<4x256xf32>
    %22 = math.exp %21 : vector<4x256xf32>
    %cst_8 = arith.constant dense<0.000000e+00> : vector<256xf32>
    %23 = vector.multi_reduction <add>, %22, %cst_8 [0] : vector<4x256xf32> to vector<256xf32>
    %24 = vector.shape_cast %23 : vector<256xf32> to vector<1x256xf32>
    %25 = tpu.reciprocal %24 {approx = true} : vector<1x256xf32> -> vector<1x256xf32>
    %26 = arith.mulf %24, %25 : vector<1x256xf32>
    %cst_9 = arith.constant 2.000000e+00 : f32
    %27 = vector.broadcast %cst_9 : f32 to vector<1x256xf32>
    %28 = arith.subf %27, %26 : vector<1x256xf32>
    %29 = arith.mulf %25, %28 : vector<1x256xf32>
    %30 = vector.broadcast %29 : vector<1x256xf32> to vector<4x256xf32>
    %31 = arith.mulf %22, %30 : vector<4x256xf32>
    %cst_10 = arith.constant 2.500000e-01 : f32
    %32 = vector.broadcast %cst_10 : f32 to vector<4x256xf32>
    %33 = arith.subf %15, %32 : vector<4x256xf32>
    %cst_11 = arith.constant 2.500000e-01 : f32
    %34 = vector.broadcast %cst_11 : f32 to vector<4x256xf32>
    %35 = arith.subf %31, %34 : vector<4x256xf32>
    %36 = arith.mulf %33, %33 : vector<4x256xf32>
    %37 = arith.mulf %35, %35 : vector<4x256xf32>
    %38 = arith.mulf %33, %35 : vector<4x256xf32>
    %cst_12 = arith.constant dense<0.000000e+00> : vector<256xf32>
    %39 = vector.multi_reduction <add>, %38, %cst_12 [0] : vector<4x256xf32> to vector<256xf32>
    %40 = vector.shape_cast %39 : vector<256xf32> to vector<1x256xf32>
    %cst_13 = arith.constant dense<0.000000e+00> : vector<256xf32>
    %41 = vector.multi_reduction <add>, %36, %cst_13 [0] : vector<4x256xf32> to vector<256xf32>
    %42 = vector.shape_cast %41 : vector<256xf32> to vector<1x256xf32>
    %cst_14 = arith.constant dense<0.000000e+00> : vector<256xf32>
    %43 = vector.multi_reduction <add>, %37, %cst_14 [0] : vector<4x256xf32> to vector<256xf32>
    %44 = vector.shape_cast %43 : vector<256xf32> to vector<1x256xf32>
    %45 = arith.mulf %42, %44 : vector<1x256xf32>
    %46 = math.sqrt %45 : vector<1x256xf32>
    %cst_15 = arith.constant 9.99999993E-9 : f32
    %47 = vector.broadcast %cst_15 : f32 to vector<1x256xf32>
    %48 = arith.addf %46, %47 : vector<1x256xf32>
    %49 = tpu.reciprocal %48 {approx = true} : vector<1x256xf32> -> vector<1x256xf32>
    %50 = arith.mulf %40, %49 : vector<1x256xf32>
    %51 = vector.shape_cast %50 : vector<1x256xf32> to vector<1x1x256xf32>
    %cst_16 = arith.constant dense<0.000000e+00> : vector<1xf32>
    %52 = vector.multi_reduction <add>, %51, %cst_16 [1, 2] : vector<1x1x256xf32> to vector<1xf32>
    %53 = vector.shape_cast %52 : vector<1xf32> to vector<1x1x1xf32>
    %54 = vector.extract %53[0, 0, 0] : f32 from vector<1x1x1xf32>
    %cst_17 = arith.constant 1.000000e+00 : f32
    %55 = vector.broadcast %cst_17 : f32 to vector<256x1xf32>
    %cst_18 = arith.constant dense<0.000000e+00> : vector<4x1xf32>
    %56 = tpu.matmul %33, %55, %cst_18 {dimension_numbers = #tpu.dot_dimension_numbers<[1], [0], [0], [1], [0, 0, 1, 1], [], []>} : vector<4x256xf32>, vector<256x1xf32>, vector<4x1xf32> -> vector<4x1xf32>
    %cst_19 = arith.constant dense<0.000000e+00> : vector<4x1xf32>
    %57 = tpu.matmul %35, %55, %cst_19 {dimension_numbers = #tpu.dot_dimension_numbers<[1], [0], [0], [1], [0, 0, 1, 1], [], []>} : vector<4x256xf32>, vector<256x1xf32>, vector<4x1xf32> -> vector<4x1xf32>
    %cst_20 = arith.constant dense<0.000000e+00> : vector<4x1xf32>
    %58 = tpu.matmul %36, %55, %cst_20 {dimension_numbers = #tpu.dot_dimension_numbers<[1], [0], [0], [1], [0, 0, 1, 1], [], []>} : vector<4x256xf32>, vector<256x1xf32>, vector<4x1xf32> -> vector<4x1xf32>
    %cst_21 = arith.constant dense<0.000000e+00> : vector<4x1xf32>
    %59 = tpu.matmul %37, %55, %cst_21 {dimension_numbers = #tpu.dot_dimension_numbers<[1], [0], [0], [1], [0, 0, 1, 1], [], []>} : vector<4x256xf32>, vector<256x1xf32>, vector<4x1xf32> -> vector<4x1xf32>
    %cst_22 = arith.constant dense<0.000000e+00> : vector<4x1xf32>
    %60 = tpu.matmul %38, %55, %cst_22 {dimension_numbers = #tpu.dot_dimension_numbers<[1], [0], [0], [1], [0, 0, 1, 1], [], []>} : vector<4x256xf32>, vector<256x1xf32>, vector<4x1xf32> -> vector<4x1xf32>
    %61 = vector.broadcast %54 : f32 to vector<4x1xf32>
    %62 = tpu.concatenate %56, %57, %58, %59, %60, %61 in 1 : vector<4x1xf32>, vector<4x1xf32>, vector<4x1xf32>, vector<4x1xf32>, vector<4x1xf32>, vector<4x1xf32> -> vector<4x6xf32>
    %c0_23 = arith.constant 0 : index
    %c0_24 = arith.constant 0 : index
    %c0_25 = arith.constant 0 : index
    %c0_26 = arith.constant 0 : index
    %63 = vector.load %arg4[%c0_23, %c0_24, %c0_25, %c0_26] : memref<1x1x4x6xf32, #tpu.memory_space<vmem>>, vector<1x1x4x6xf32>
    %64 = vector.shape_cast %63 : vector<1x1x4x6xf32> to vector<4x6xf32>
    %65 = vector.shape_cast %62 : vector<4x6xf32> to vector<1x1x4x6xf32>
    tpu.vector_store %arg4[%c0_23, %c0_24, %c0_25, %c0_26], %65 {strides = array<i32>} : memref<1x1x4x6xf32, #tpu.memory_space<vmem>>, vector<1x1x4x6xf32>,
    return
  }
  func.func @transform_0(%arg0: i32, %arg1: i32) -> (i32, i32, i32) {
    %c0_i32 = arith.constant 0 : i32
    %c0_i32_0 = arith.constant 0 : i32
    return %arg0, %c0_i32, %arg1 : i32, i32, i32
  }
  func.func @transform_1(%arg0: i32, %arg1: i32) -> (i32, i32, i32) {
    %c0_i32 = arith.constant 0 : i32
    %c0_i32_0 = arith.constant 0 : i32
    return %arg0, %c0_i32, %arg1 : i32, i32, i32
  }
  func.func @transform_2(%arg0: i32, %arg1: i32) -> (i32, i32, i32, i32) {
    %c0_i32 = arith.constant 0 : i32
    %c0_i32_0 = arith.constant 0 : i32
    %c0_i32_1 = arith.constant 0 : i32
    return %arg0, %arg1, %c0_i32, %c0_i32_0 : i32, i32, i32, i32
  }
}

</mosaic_0001>

<llo_original>
// kernel: tpu_custom_call.1
$region0: #{tpu_custom_call.1}
  #allocation0 [shape = 'u32[]', space=smem, size = 0x4, offset = 0x4, fixed_abs, tag = 'smem constant byte address 0x4 - core index']
  #allocation1 [shape = 'u32[72,128]{1,0:T(1,128)}', space=vmem, size = 0x9000, scoped, tag = 'internal scratch']
  %s0 = inlined_call_operand.hbm [shape: f32[2,4,256], index: 0, kind: input, shape index: {}]
  %s1 = inlined_call_operand.hbm [shape: f32[2,4,256], index: 1, kind: input, shape index: {}]
  %s2 = inlined_call_operand.hbm [shape: f32[2,1,4,6], index: 2, kind: output, shape index: {}]
  %s3 = sld [smem:[#allocation0]]
  $region49: #{tpu_custom_call.1} parent=0
    _
  %s5 = ssub.s32 1, %s3
  %s6 = scalar_select 0, %s5, %s3
  $region1: #{tpu_custom_call.1} parent=0
    #allocation2 [shape = 'u8[8192]{0}', space=vmem, size = 0x2000, scoped, tag = 'input window, operand 0']
    #allocation3 [shape = 's32[2]{0}', space=sflag, size = 0x8, scoped, tag = 'scoped memory for tpu_custom_call.1']
    #allocation4 [shape = 's32[2]{0}', space=sflag, size = 0x8, scoped, tag = 'scoped memory for tpu_custom_call.1']
    #allocation5 [shape = 'u8[8192]{0}', space=vmem, size = 0x2000, scoped, tag = 'input window, operand 1']
    #allocation6 [shape = 's32[2]{0}', space=sflag, size = 0x8, scoped, tag = 'scoped memory for tpu_custom_call.1']
    #allocation7 [shape = 'u8[4096]{0}', space=vmem, size = 0x1000, scoped, tag = 'output window, operand 0']
    %7 = vsyncpa [#allocation3], 0
    %s8 = scalar_lea.sflag [#allocation3], 1
    %9 = vsyncpa %s8, 0
    %10 = vsyncpa [#allocation6], 0
    %s11 = scalar_lea.sflag [#allocation6], 1
    %12 = vsyncpa %s11, 0
    %13 = vsyncpa [#allocation4], 0
    %s14 = scalar_lea.sflag [#allocation4], 1
    %15 = vsyncpa %s14, 0
    loop: start=0, step=1, limit=4
    $region2: #{tpu_custom_call.1} parent=1 // loop_pre_header
      _
    $region3: #{tpu_custom_call.1} parent=1 // loop_header
      %s17 = sphi 0, %s21
      %p18 = scmp.ge.s32.totalorder %s17, 4
      %s24 = sphi 0, %s36
      %s25 = sphi 0, %s32
      %s26 = sphi 0, %s24
      %s27 = sphi 0, %s25
      %s28 = sphi 0, %s26
      %s29 = sphi 0, %s27
      %s41 = sphi 0, %s43
      %s44 = sphi 0, %s41
      %s45 = sphi 0, %s44
      %s61 = sphi 0, %s45
      %s69 = sphi 0, %s71
      %s72 = sphi 0, %s69
      %s73 = sphi 0, %s72
      %s89 = sphi 0, %s73
      %s97 = sphi 0, %s99
      %s100 = sphi 0, %s97
      %s101 = sphi 0, %s100
      %s117 = sphi 0, %s101
    $region4: #{tpu_custom_call.1} parent=1 // loop_header_branch
      %20 = sbr.rel (%p18) target = $region8
    $region5: #{tpu_custom_call.1} parent=1 // loop_body
      %s22 = ssub.s32 %s17, 1
      %s23 = ssub.s32 %s17, 2
      %s30 = sadd.s32 1, %s25
      %p31 = scmp.ge.s32.totalorder %s30, 1
      %s32 = scalar_select %p31, 0, %s30
      %s33 = sadd.s32 1, %s24
      %s34 = scalar_select %p31, %s33, %s24
      %p35 = scmp.ge.s32.totalorder %s34, 2
      %s36 = scalar_select %p35, 0, %s34
      %s37 = ssub.s32 %s24, %s36
      %s38 = ssub.s32 %s25, %s32
      %s39 = sor.u32 %s37, %s38
      %p40 = scmp.eq.s32.totalorder %s39, 0
      %s42 = sadd.s32 %s41, 1
      %s43 = scalar_select %p40, %s41, %s42
      %p46 = pneg %p40
      %p47 = scmp.eq.s32.totalorder %s17, 1
      %p48 = por %p46, %p47
      %p49 = scmp.ne.s32.totalorder %s41, %s44
      %p50 = scmp.eq.s32.totalorder %s17, 0
      %p51 = por %p49, %p50
      %p52 = scmp.ne.s32.totalorder %s41, %s44
      %p53 = scmp.eq.s32.totalorder %s22, 1
      %p54 = por %p52, %p53
      %p55 = scmp.ne.s32.totalorder %s44, %s45
      %p56 = scmp.eq.s32.totalorder %s22, 0
      %p57 = por %p55, %p56
      %p58 = scmp.ne.s32.totalorder %s44, %s45
      %p59 = scmp.eq.s32.totalorder %s23, 1
      %p60 = por %p58, %p59
      %p62 = scmp.ne.s32.totalorder %s45, %s61
      %p63 = scmp.eq.s32.totalorder %s23, 0
      %p64 = por %p62, %p63
      %s65 = ssub.s32 %s24, %s36
      %s66 = ssub.s32 %s25, %s32
      %s67 = sor.u32 %s65, %s66
      %p68 = scmp.eq.s32.totalorder %s67, 0
      %s70 = sadd.s32 %s69, 1
      %s71 = scalar_select %p68, %s69, %s70
      %p74 = pneg %p68
      %p75 = scmp.eq.s32.totalorder %s17, 1
      %p76 = por %p74, %p75
      %p77 = scmp.ne.s32.totalorder %s69, %s72
      %p78 = scmp.eq.s32.totalorder %s17, 0
      %p79 = por %p77, %p78
      %p80 = scmp.ne.s32.totalorder %s69, %s72
      %p81 = scmp.eq.s32.totalorder %s22, 1
      %p82 = por %p80, %p81
      %p83 = scmp.ne.s32.totalorder %s72, %s73
      %p84 = scmp.eq.s32.totalorder %s22, 0
      %p85 = por %p83, %p84
      %p86 = scmp.ne.s32.totalorder %s72, %s73
      %p87 = scmp.eq.s32.totalorder %s23, 1
      %p88 = por %p86, %p87
      %p90 = scmp.ne.s32.totalorder %s73, %s89
      %p91 = scmp.eq.s32.totalorder %s23, 0
      %p92 = por %p90, %p91
      %s93 = ssub.s32 %s24, %s36
      %s94 = ssub.s32 %s25, %s32
      %s95 = sor.u32 %s93, %s94
      %p96 = scmp.eq.s32.totalorder %s95, 0
      %s98 = sadd.s32 %s97, 1
      %s99 = scalar_select %p96, %s97, %s98
      %p102 = pneg %p96
      %p103 = scmp.eq.s32.totalorder %s17, 1
      %p104 = por %p102, %p103
      %p105 = scmp.ne.s32.totalorder %s97, %s100
      %p106 = scmp.eq.s32.totalorder %s17, 0
      %p107 = por %p105, %p106
      %p108 = scmp.ne.s32.totalorder %s97, %s100
      %p109 = scmp.eq.s32.totalorder %s22, 1
      %p110 = por %p108, %p109
      %p111 = scmp.ne.s32.totalorder %s100, %s101
      %p112 = scmp.eq.s32.totalorder %s22, 0
      %p113 = por %p111, %p112
      %p114 = scmp.ne.s32.totalorder %s100, %s101
      %p115 = scmp.eq.s32.totalorder %s23, 1
      %p116 = por %p114, %p115
      %p118 = scmp.ne.s32.totalorder %s101, %s117
      %p119 = scmp.eq.s32.totalorder %s23, 0
      %p120 = por %p118, %p119
      %p121 = scmp.le.s32.totalorder 1, %s17
      %p122 = scmp.lt.s32.totalorder %s17, 3
      %p123 = pnand %p121, %p122
      %p124 = pneg %p123
      // Predicated region
      $region9: #{tpu_custom_call.1} parent=5 // pred_check
        _
      $region10: #{tpu_custom_call.1} parent=5 // pred_check_branch
        %126 = sbr.rel (%p123) target = $region12
      $region11: #{tpu_custom_call.1} parent=5 // pred_region
        %s127 = ssub.s32 %s17, 1
      $region12: #{tpu_custom_call.1} parent=5 // pred_fallthru
        _
      %p128 = scmp.lt.s32.totalorder %s17, 2
      // Predicated region
      $region13: #{tpu_custom_call.1} parent=5 // pred_check
        %p129 = pneg %p128
      $region14: #{tpu_custom_call.1} parent=5 // pred_check_branch
        %131 = sbr.rel (%p129) target = $region16
      $region15: #{tpu_custom_call.1} parent=5 // pred_region
        // Predicated region
        $region17: #{tpu_custom_call.1} parent=15 // pred_check
          %p132 = pneg %p51
        $region18: #{tpu_custom_call.1} parent=15 // pred_check_branch
          %134 = sbr.rel (%p132) target = $region20
        $region19: #{tpu_custom_call.1} parent=15 // pred_region
          %s135 = sand.u32 %s41, 1
          %s136 = scalar_lea.sflag [#allocation3], %s135
          %s137 = sand.u32 %s41, 1
          %s138 = smul.addr %s137, 8
          %s139 = scalar_lea.vmem [#allocation2], %s138
          %s140 = smul.u32 2, %s25
          %142 = vsyncadd %s136, 0
          %s143 = smul.addr %s24, 2
          %s144 = sadd.s32 %s140, %s143
          %s145 = smul.addr %s144, 4
          %s146 = scalar_lea.hbm %s0, %s145
          %s148 = sshll.u32 %s146, 4
          %s149 = int_to_ptr.hbm [resolvable:$true] %s148
          %s150 = sshll.u32 %s139, 4
          %s151 = int_to_ptr.vmem [resolvable:$true] %s150
          %153 = dma.hbm_to_vmem [thread:$0]  %s149, 128, %s151, %s136
        $region20: #{tpu_custom_call.1} parent=15 // pred_fallthru
          _
        // Predicated region
        $region21: #{tpu_custom_call.1} parent=15 // pred_check
          %p154 = pneg %p79
        $region22: #{tpu_custom_call.1} parent=15 // pred_check_branch
          %156 = sbr.rel (%p154) target = $region24
        $region23: #{tpu_custom_call.1} parent=15 // pred_region
          %s157 = sand.u32 %s69, 1
          %s158 = scalar_lea.sflag [#allocation6], %s157
          %s159 = sand.u32 %s69, 1
          %s160 = smul.addr %s159, 8
          %s161 = scalar_lea.vmem [#allocation5], %s160
          %s162 = smul.u32 2, %s25
          %164 = vsyncadd %s158, 0
          %s165 = smul.addr %s24, 2
          %s166 = sadd.s32 %s162, %s165
          %s167 = smul.addr %s166, 4
          %s168 = scalar_lea.hbm %s1, %s167
          %s170 = sshll.u32 %s168, 4
          %s171 = int_to_ptr.hbm [resolvable:$true] %s170
          %s172 = sshll.u32 %s161, 4
          %s173 = int_to_ptr.vmem [resolvable:$true] %s172
          %175 = dma.hbm_to_vmem [thread:$0]  %s171, 128, %s173, %s158
        $region24: #{tpu_custom_call.1} parent=15 // pred_fallthru
          _
      $region16: #{tpu_custom_call.1} parent=5 // pred_fallthru
        _
      %p176 = scmp.le.s32.totalorder 1, %s17
      %p177 = scmp.lt.s32.totalorder %s17, 3
      %p178 = pnand %p176, %p177
      %p179 = pneg %p178
      // Predicated region
      $region25: #{tpu_custom_call.1} parent=5 // pred_check
        _
      $region26: #{tpu_custom_call.1} parent=5 // pred_check_branch
        %181 = sbr.rel (%p178) target = $region28
      $region27: #{tpu_custom_call.1} parent=5 // pred_region
        %s182 = ssub.s32 %s17, 1
        %s183 = sand.u32 %s44, 1
        %s184 = scalar_lea.sflag [#allocation3], %s183
        %s185 = sand.u32 %s44, 1
        %s186 = smul.addr %s185, 8
        %s187 = scalar_lea.vmem [#allocation2], %s186
        // Predicated region
        $region29: #{tpu_custom_call.1} parent=27 // pred_check
          %p188 = pneg %p57
        $region30: #{tpu_custom_call.1} parent=27 // pred_check_branch
          %190 = sbr.rel (%p188) target = $region32
        $region31: #{tpu_custom_call.1} parent=27 // pred_region
          %192 = dma.done %s184, 128
        $region32: #{tpu_custom_call.1} parent=27 // pred_fallthru
          _
        %s193 = sand.u32 %s72, 1
        %s194 = scalar_lea.sflag [#allocation6], %s193
        %s195 = sand.u32 %s72, 1
        %s196 = smul.addr %s195, 8
        %s197 = scalar_lea.vmem [#allocation5], %s196
        // Predicated region
        $region33: #{tpu_custom_call.1} parent=27 // pred_check
          %p198 = pneg %p85
        $region34: #{tpu_custom_call.1} parent=27 // pred_check_branch
          %200 = sbr.rel (%p198) target = $region36
        $region35: #{tpu_custom_call.1} parent=27 // pred_region
          %202 = dma.done %s194, 128
        $region36: #{tpu_custom_call.1} parent=27 // pred_fallthru
          _
        %s203 = sand.u32 %s44, 1
        %s204 = scalar_lea.sflag [#allocation3], %s203
        %s205 = sand.u32 %s44, 1
        %s206 = smul.addr %s205, 8
        %s207 = scalar_lea.vmem [#allocation2], %s206
        %p208 = pneg %p57
        %p209 = pneg %p54
        %s210 = sand.u32 %s72, 1
        %s211 = scalar_lea.sflag [#allocation6], %s210
        %s212 = sand.u32 %s72, 1
        %s213 = smul.addr %s212, 8
        %s214 = scalar_lea.vmem [#allocation5], %s213
        %p215 = pneg %p85
        %p216 = pneg %p82
        %p217 = pneg %p113
        %p218 = pneg %p110
        %s219 = sand.u32 %s100, 1
        %s220 = scalar_lea.sflag [#allocation4], %s219
        %s221 = sand.u32 %s100, 1
        %s222 = smul.addr %s221, 4
        %s223 = scalar_lea.vmem [#allocation7], %s222
        %s224 = smul.u32 2, %s27
        %s225 = smul.u32 2, %s27
        %v226 = vld [vmem:[%s187] sm:$0xff]
        %228 = vst [vmem:[#allocation1] ss:$2 sm:$0xff] %v226
        %v229 = vld.sshfl [vmem:[#allocation1] sm:$0xff pattern:$0x75316420]
        %v230 = vld.sshfl [vmem:[#allocation1 + $0x8] sm:$0xff pattern:$0x75316420]
        %vm233 = vcmask 1043456
        %v234 = vsel %vm233, %v229, -inf
        %v235 = vrot.slane %v234, 4
        %v236 = vmax.f32 %v234, %v235
        %v237 = vrot.slane %v236, 2
        %v238 = vmax.f32 %v236, %v237
        %v239 = vrot.slane %v238, 1
        %v240 = vmax.f32 %v238, %v239
        %v241 = vsel %vm233, %v230, -inf
        %v242 = vrot.slane %v241, 4
        %v243 = vmax.f32 %v241, %v242
        %v244 = vrot.slane %v243, 2
        %v245 = vmax.f32 %v243, %v244
        %v246 = vrot.slane %v245, 1
        %v247 = vmax.f32 %v245, %v246
        %v250 = vrot.slane %v247, 4
        %v251 = vsel %vm233, %v240, %v250
        %v253 = vsub.f32 %v226, %v251
        %v254 = vmul.f32 %v253, 1.442695
        %v255 = vpow.pop %v254
        %257 = vst [vmem:[#allocation1] ss:$2 sm:$0xff] %v255
        %v258 = vld.sshfl [vmem:[#allocation1] sm:$0xff pattern:$0x75316420]
        %v259 = vld.sshfl [vmem:[#allocation1 + $0x8] sm:$0xff pattern:$0x75316420]
        %v262 = vsel %vm233, %v258, 0.0
        %v263 = vrot.slane %v262, 4
        %v264 = vadd.f32 %v262, %v263
        %v265 = vrot.slane %v264, 2
        %v266 = vadd.f32 %v264, %v265
        %v267 = vrot.slane %v266, 1
        %v268 = vadd.f32 %v266, %v267
        %v269 = vsel %vm233, %v259, 0.0
        %v270 = vrot.slane %v269, 4
        %v271 = vadd.f32 %v269, %v270
        %v272 = vrot.slane %v271, 2
        %v273 = vadd.f32 %v271, %v272
        %v274 = vrot.slane %v273, 1
        %v275 = vadd.f32 %v273, %v274
        %v276 = vrcp.pop %v268
        %v277 = vrcp.pop %v275
        %v278 = vmul.f32 %v268, %v276
        %v279 = vmul.f32 %v275, %v277
        %v280 = vsub.f32 2.0, %v278
        %v281 = vsub.f32 2.0, %v279
        %v282 = vmul.f32 %v276, %v280
        %v283 = vmul.f32 %v277, %v281
        %v286 = vrot.slane %v283, 4
        %v287 = vsel %vm233, %v282, %v286
        %v289 = vmul.f32 %v255, %v287
        %v290 = vld [vmem:[%s197] sm:$0xff]
        %292 = vst [vmem:[#allocation1] ss:$2 sm:$0xff] %v290
        %v293 = vld.sshfl [vmem:[#allocation1] sm:$0xff pattern:$0x75316420]
        %v294 = vld.sshfl [vmem:[#allocation1 + $0x8] sm:$0xff pattern:$0x75316420]
        %v297 = vsel %vm233, %v293, -inf
        %v298 = vrot.slane %v297, 4
        %v299 = vmax.f32 %v297, %v298
        %v300 = vrot.slane %v299, 2
        %v301 = vmax.f32 %v299, %v300
        %v302 = vrot.slane %v301, 1
        %v303 = vmax.f32 %v301, %v302
        %v304 = vsel %vm233, %v294, -inf
        %v305 = vrot.slane %v304, 4
        %v306 = vmax.f32 %v304, %v305
        %v307 = vrot.slane %v306, 2
        %v308 = vmax.f32 %v306, %v307
        %v309 = vrot.slane %v308, 1
        %v310 = vmax.f32 %v308, %v309
        %v313 = vrot.slane %v310, 4
        %v314 = vsel %vm233, %v303, %v313
        %v316 = vsub.f32 %v290, %v314
        %v317 = vmul.f32 %v316, 1.442695
        %v318 = vpow.pop %v317
        %320 = vst [vmem:[#allocation1] ss:$2 sm:$0xff] %v318
        %v321 = vld.sshfl [vmem:[#allocation1] sm:$0xff pattern:$0x75316420]
        %v322 = vld.sshfl [vmem:[#allocation1 + $0x8] sm:$0xff pattern:$0x75316420]
        %v325 = vsel %vm233, %v321, 0.0
        %v326 = vrot.slane %v325, 4
        %v327 = vadd.f32 %v325, %v326
        %v328 = vrot.slane %v327, 2
        %v329 = vadd.f32 %v327, %v328
        %v330 = vrot.slane %v329, 1
        %v331 = vadd.f32 %v329, %v330
        %v332 = vsel %vm233, %v322, 0.0
        %v333 = vrot.slane %v332, 4
        %v334 = vadd.f32 %v332, %v333
        %v335 = vrot.slane %v334, 2
        %v336 = vadd.f32 %v334, %v335
        %v337 = vrot.slane %v336, 1
        %v338 = vadd.f32 %v336, %v337
        %v339 = vrcp.pop %v331
        %v340 = vrcp.pop %v338
        %v341 = vmul.f32 %v331, %v339
        %v342 = vmul.f32 %v338, %v340
        %v343 = vsub.f32 2.0, %v341
        %v344 = vsub.f32 2.0, %v342
        %v345 = vmul.f32 %v339, %v343
        %v346 = vmul.f32 %v340, %v344
        %v349 = vrot.slane %v346, 4
        %v350 = vsel %vm233, %v345, %v349
        %v352 = vmul.f32 %v318, %v350
        %v353 = vsub.f32 %v289, 0.25
        %v354 = vsub.f32 %v352, 0.25
        %v355 = vmul.f32 %v353, %v353
        %v356 = vmul.f32 %v354, %v354
        %v357 = vmul.f32 %v353, %v354
        %359 = vst [vmem:[#allocation1] ss:$2 sm:$0xff] %v357
        %v360 = vld.sshfl [vmem:[#allocation1] sm:$0xff pattern:$0x75316420]
        %v361 = vld.sshfl [vmem:[#allocation1 + $0x8] sm:$0xff pattern:$0x75316420]
        %v364 = vsel %vm233, %v360, 0.0
        %v365 = vrot.slane %v364, 4
        %v366 = vadd.f32 %v364, %v365
        %v367 = vrot.slane %v366, 2
        %v368 = vadd.f32 %v366, %v367
        %v369 = vrot.slane %v368, 1
        %v370 = vadd.f32 %v368, %v369
        %v371 = vsel %vm233, %v361, 0.0
        %v372 = vrot.slane %v371, 4
        %v373 = vadd.f32 %v371, %v372
        %v374 = vrot.slane %v373, 2
        %v375 = vadd.f32 %v373, %v374
        %v376 = vrot.slane %v375, 1
        %v377 = vadd.f32 %v375, %v376
        %379 = vst [vmem:[#allocation1] ss:$2 sm:$0xff] %v355
        %v380 = vld.sshfl [vmem:[#allocation1] sm:$0xff pattern:$0x75316420]
        %v381 = vld.sshfl [vmem:[#allocation1 + $0x8] sm:$0xff pattern:$0x75316420]
        %v384 = vsel %vm233, %v380, 0.0
        %v385 = vrot.slane %v384, 4
        %v386 = vadd.f32 %v384, %v385
        %v387 = vrot.slane %v386, 2
        %v388 = vadd.f32 %v386, %v387
        %v389 = vrot.slane %v388, 1
        %v390 = vadd.f32 %v388, %v389
        %v391 = vsel %vm233, %v381, 0.0
        %v392 = vrot.slane %v391, 4
        %v393 = vadd.f32 %v391, %v392
        %v394 = vrot.slane %v393, 2
        %v395 = vadd.f32 %v393, %v394
        %v396 = vrot.slane %v395, 1
        %v397 = vadd.f32 %v395, %v396
        %399 = vst [vmem:[#allocation1] ss:$2 sm:$0xff] %v356
        %v400 = vld.sshfl [vmem:[#allocation1] sm:$0xff pattern:$0x75316420]
        %v401 = vld.sshfl [vmem:[#allocation1 + $0x8] sm:$0xff pattern:$0x75316420]
        %v404 = vsel %vm233, %v400, 0.0
        %v405 = vrot.slane %v404, 4
        %v406 = vadd.f32 %v404, %v405
        %v407 = vrot.slane %v406, 2
        %v408 = vadd.f32 %v406, %v407
        %v409 = vrot.slane %v408, 1
        %v410 = vadd.f32 %v408, %v409
        %v411 = vsel %vm233, %v401, 0.0
        %v412 = vrot.slane %v411, 4
        %v413 = vadd.f32 %v411, %v412
        %v414 = vrot.slane %v413, 2
        %v415 = vadd.f32 %v413, %v414
        %v416 = vrot.slane %v415, 1
        %v417 = vadd.f32 %v415, %v416
        %v418 = vmul.f32 %v390, %v410
        %v419 = vmul.f32 %v397, %v417
        %v420 = vrsqrt.pop %v418
        %v421 = vmul.f32 %v420, %v418
        %v422 = vmul.f32 %v421, %v420
        %v423 = vmul.f32 0.5, %v422
        %v424 = vsub.f32 1.5, %v423
        %v425 = vmul.f32 %v420, %v424
        %v426 = vmul.f32 %v418, %v425
        %vm427 = vcmp.eq.f32.partialorder %v418, inf
        %v428 = vsel %vm427, %v418, %v426
        %vm429 = vcmp.eq.f32.partialorder %v418, 0.0
        %v430 = vand.u32 %v418, 2147483648
        %v431 = vsel %vm429, %v430, %v428
        %v432 = vrsqrt.pop %v419
        %v433 = vmul.f32 %v432, %v419
        %v434 = vmul.f32 %v433, %v432
        %v435 = vmul.f32 0.5, %v434
        %v436 = vsub.f32 1.5, %v435
        %v437 = vmul.f32 %v432, %v436
        %v438 = vmul.f32 %v419, %v437
        %vm439 = vcmp.eq.f32.partialorder %v419, inf
        %v440 = vsel %vm439, %v419, %v438
        %vm441 = vcmp.eq.f32.partialorder %v419, 0.0
        %v442 = vand.u32 %v419, 2147483648
        %v443 = vsel %vm441, %v442, %v440
        %v444 = vadd.f32 %v431, 1e-08
        %v445 = vadd.f32 %v443, 1e-08
        %v446 = vrcp.pop %v444
        %v447 = vrcp.pop %v445
        %v448 = vmul.f32 %v370, %v446
        %v449 = vmul.f32 %v377, %v447
        %vm450 = vcmask 1040384
        %v451 = vsel %vm450, %v448, 0.0
        %v452 = vsel %vm450, %v449, 0.0
        %v453 = vadd.f32 %v451, %v452
        %454 = vadd.xlane.f32.xlu0 %v453
        %v455 = vpop.xlane.xlu0 %454
        %v456 = vrot.slane %v455, 4
        %v457 = vadd.f32 %v455, %v456
        %v458 = vrot.slane %v457, 2
        %v459 = vadd.f32 %v457, %v458
        %v460 = vrot.slane %v459, 1
        %v461 = vadd.f32 %v459, %v460
        %s462 = vtos %v461
        %464 = vst [vmem:[#allocation1] ss:$2 sm:$0xff] %v353
        %v465 = vld.sshfl [vmem:[#allocation1] sm:$0xff pattern:$0x75316420]
        %v466 = vld.sshfl [vmem:[#allocation1 + $0x8] sm:$0xff pattern:$0x75316420]
        %469 = vmatpush.msra.mxu0 1.0
        %470 = vmatpush.msra.mxu0 1.0
        %471 = vmatpush.msra.mxu0 1.0
        %472 = vmatpush.msra.mxu0 1.0
        %473 = vmatpush.msra.mxu0 1.0
        %474 = vmatpush.msra.mxu0 1.0
        %475 = vmatpush.msra.mxu0 1.0
        %476 = vmatpush.msra.mxu0 1.0
        %477 = vmatpush.msra.mxu0 1.0
        %478 = vmatpush.msra.mxu0 1.0
        %479 = vmatpush.msra.mxu0 1.0
        %480 = vmatpush.msra.mxu0 1.0
        %481 = vmatpush.msra.mxu0 1.0
        %482 = vmatpush.msra.mxu0 1.0
        %483 = vmatpush.msra.mxu0 1.0
        %484 = vmatpush.msra.mxu0 1.0
        %485 = vmatmul.f32.gmra.mxu0 %v465
        %v486 = vpop.f32.mrf.mxu0
        %v487 = vadd.f32 0.0, %v486
        %488 = vdwg.mxu0
        %489 = vmatpush.msra.mxu0 1.0
        %490 = vmatpush.msra.mxu0 1.0
        %491 = vmatpush.msra.mxu0 1.0
        %492 = vmatpush.msra.mxu0 1.0
        %493 = vmatpush.msra.mxu0 1.0
        %494 = vmatpush.msra.mxu0 1.0
        %495 = vmatpush.msra.mxu0 1.0
        %496 = vmatpush.msra.mxu0 1.0
        %497 = vmatpush.msra.mxu0 1.0
        %498 = vmatpush.msra.mxu0 1.0
        %499 = vmatpush.msra.mxu0 1.0
        %500 = vmatpush.msra.mxu0 1.0
        %501 = vmatpush.msra.mxu0 1.0
        %502 = vmatpush.msra.mxu0 1.0
        %503 = vmatpush.msra.mxu0 1.0
        %504 = vmatpush.msra.mxu0 1.0
        %505 = vmatmul.f32.gmra.mxu0 %v466
        %v506 = vpop.f32.mrf.mxu0
        %v507 = vadd.f32 %v487, %v506
        %508 = vdwg.mxu0
        %510 = vst [vmem:[#allocation1] ss:$2 sm:$0xff] %v354
        %v511 = vld.sshfl [vmem:[#allocation1] sm:$0xff pattern:$0x75316420]
        %v512 = vld.sshfl [vmem:[#allocation1 + $0x8] sm:$0xff pattern:$0x75316420]
        %515 = vmatpush.msra.mxu0 1.0
        %516 = vmatpush.msra.mxu0 1.0
        %517 = vmatpush.msra.mxu0 1.0
        %518 = vmatpush.msra.mxu0 1.0
        %519 = vmatpush.msra.mxu0 1.0
        %520 = vmatpush.msra.mxu0 1.0
        %521 = vmatpush.msra.mxu0 1.0
        %522 = vmatpush.msra.mxu0 1.0
        %523 = vmatpush.msra.mxu0 1.0
        %524 = vmatpush.msra.mxu0 1.0
        %525 = vmatpush.msra.mxu0 1.0
        %526 = vmatpush.msra.mxu0 1.0
        %527 = vmatpush.msra.mxu0 1.0
        %528 = vmatpush.msra.mxu0 1.0
        %529 = vmatpush.msra.mxu0 1.0
        %530 = vmatpush.msra.mxu0 1.0
        %531 = vmatmul.f32.gmra.mxu0 %v511
        %v532 = vpop.f32.mrf.mxu0
        %v533 = vadd.f32 0.0, %v532
        %534 = vdwg.mxu0
        %535 = vmatpush.msra.mxu0 1.0
        %536 = vmatpush.msra.mxu0 1.0
        %537 = vmatpush.msra.mxu0 1.0
        %538 = vmatpush.msra.mxu0 1.0
        %539 = vmatpush.msra.mxu0 1.0
        %540 = vmatpush.msra.mxu0 1.0
        %541 = vmatpush.msra.mxu0 1.0
        %542 = vmatpush.msra.mxu0 1.0
        %543 = vmatpush.msra.mxu0 1.0
        %544 = vmatpush.msra.mxu0 1.0
        %545 = vmatpush.msra.mxu0 1.0
        %546 = vmatpush.msra.mxu0 1.0
        %547 = vmatpush.msra.mxu0 1.0
        %548 = vmatpush.msra.mxu0 1.0
        %549 = vmatpush.msra.mxu0 1.0
        %550 = vmatpush.msra.mxu0 1.0
        %551 = vmatmul.f32.gmra.mxu0 %v512
        %v552 = vpop.f32.mrf.mxu0
        %v553 = vadd.f32 %v533, %v552
        %554 = vdwg.mxu0
        %555 = vst [vmem:[#allocation1] ss:$2 sm:$0xff] %v355
        %v556 = vld.sshfl [vmem:[#allocation1] sm:$0xff pattern:$0x75316420]
        %v557 = vld.sshfl [vmem:[#allocation1 + $0x8] sm:$0xff pattern:$0x75316420]
        %560 = vmatpush.msra.mxu0 1.0
        %561 = vmatpush.msra.mxu0 1.0
        %562 = vmatpush.msra.mxu0 1.0
        %563 = vmatpush.msra.mxu0 1.0
        %564 = vmatpush.msra.mxu0 1.0
        %565 = vmatpush.msra.mxu0 1.0
        %566 = vmatpush.msra.mxu0 1.0
        %567 = vmatpush.msra.mxu0 1.0
        %568 = vmatpush.msra.mxu0 1.0
        %569 = vmatpush.msra.mxu0 1.0
        %570 = vmatpush.msra.mxu0 1.0
        %571 = vmatpush.msra.mxu0 1.0
        %572 = vmatpush.msra.mxu0 1.0
        %573 = vmatpush.msra.mxu0 1.0
        %574 = vmatpush.msra.mxu0 1.0
        %575 = vmatpush.msra.mxu0 1.0
        %576 = vmatmul.f32.gmra.mxu0 %v556
        %v577 = vpop.f32.mrf.mxu0
        %v578 = vadd.f32 0.0, %v577
        %579 = vdwg.mxu0
        %580 = vmatpush.msra.mxu0 1.0
        %581 = vmatpush.msra.mxu0 1.0
        %582 = vmatpush.msra.mxu0 1.0
        %583 = vmatpush.msra.mxu0 1.0
        %584 = vmatpush.msra.mxu0 1.0
        %585 = vmatpush.msra.mxu0 1.0
        %586 = vmatpush.msra.mxu0 1.0
        %587 = vmatpush.msra.mxu0 1.0
        %588 = vmatpush.msra.mxu0 1.0
        %589 = vmatpush.msra.mxu0 1.0
        %590 = vmatpush.msra.mxu0 1.0
        %591 = vmatpush.msra.mxu0 1.0
        %592 = vmatpush.msra.mxu0 1.0
        %593 = vmatpush.msra.mxu0 1.0
        %594 = vmatpush.msra.mxu0 1.0
        %595 = vmatpush.msra.mxu0 1.0
        %596 = vmatmul.f32.gmra.mxu0 %v557
        %v597 = vpop.f32.mrf.mxu0
        %v598 = vadd.f32 %v578, %v597
        %599 = vdwg.mxu0
        %600 = vst [vmem:[#allocation1] ss:$2 sm:$0xff] %v356
        %v601 = vld.sshfl [vmem:[#allocation1] sm:$0xff pattern:$0x75316420]
        %v602 = vld.sshfl [vmem:[#allocation1 + $0x8] sm:$0xff pattern:$0x75316420]
        %605 = vmatpush.msra.mxu0 1.0
        %606 = vmatpush.msra.mxu0 1.0
        %607 = vmatpush.msra.mxu0 1.0
        %608 = vmatpush.msra.mxu0 1.0
        %609 = vmatpush.msra.mxu0 1.0
        %610 = vmatpush.msra.mxu0 1.0
        %611 = vmatpush.msra.mxu0 1.0
        %612 = vmatpush.msra.mxu0 1.0
        %613 = vmatpush.msra.mxu0 1.0
        %614 = vmatpush.msra.mxu0 1.0
        %615 = vmatpush.msra.mxu0 1.0
        %616 = vmatpush.msra.mxu0 1.0
        %617 = vmatpush.msra.mxu0 1.0
        %618 = vmatpush.msra.mxu0 1.0
        %619 = vmatpush.msra.mxu0 1.0
        %620 = vmatpush.msra.mxu0 1.0
        %621 = vmatmul.f32.gmra.mxu0 %v601
        %v622 = vpop.f32.mrf.mxu0
        %v623 = vadd.f32 0.0, %v622
        %624 = vdwg.mxu0
        %625 = vmatpush.msra.mxu0 1.0
        %626 = vmatpush.msra.mxu0 1.0
        %627 = vmatpush.msra.mxu0 1.0
        %628 = vmatpush.msra.mxu0 1.0
        %629 = vmatpush.msra.mxu0 1.0
        %630 = vmatpush.msra.mxu0 1.0
        %631 = vmatpush.msra.mxu0 1.0
        %632 = vmatpush.msra.mxu0 1.0
        %633 = vmatpush.msra.mxu0 1.0
        %634 = vmatpush.msra.mxu0 1.0
        %635 = vmatpush.msra.mxu0 1.0
        %636 = vmatpush.msra.mxu0 1.0
        %637 = vmatpush.msra.mxu0 1.0
        %638 = vmatpush.msra.mxu0 1.0
        %639 = vmatpush.msra.mxu0 1.0
        %640 = vmatpush.msra.mxu0 1.0
        %641 = vmatmul.f32.gmra.mxu0 %v602
        %v642 = vpop.f32.mrf.mxu0
        %v643 = vadd.f32 %v623, %v642
        %644 = vdwg.mxu0
        %645 = vst [vmem:[#allocation1] ss:$2 sm:$0xff] %v357
        %v646 = vld.sshfl [vmem:[#allocation1] sm:$0xff pattern:$0x75316420]
        %v647 = vld.sshfl [vmem:[#allocation1 + $0x8] sm:$0xff pattern:$0x75316420]
        %650 = vmatpush.msra.mxu0 1.0
        %651 = vmatpush.msra.mxu0 1.0
        %652 = vmatpush.msra.mxu0 1.0
        %653 = vmatpush.msra.mxu0 1.0
        %654 = vmatpush.msra.mxu0 1.0
        %655 = vmatpush.msra.mxu0 1.0
        %656 = vmatpush.msra.mxu0 1.0
        %657 = vmatpush.msra.mxu0 1.0
        %658 = vmatpush.msra.mxu0 1.0
        %659 = vmatpush.msra.mxu0 1.0
        %660 = vmatpush.msra.mxu0 1.0
        %661 = vmatpush.msra.mxu0 1.0
        %662 = vmatpush.msra.mxu0 1.0
        %663 = vmatpush.msra.mxu0 1.0
        %664 = vmatpush.msra.mxu0 1.0
        %665 = vmatpush.msra.mxu0 1.0
        %666 = vmatmul.f32.gmra.mxu0 %v646
        %v667 = vpop.f32.mrf.mxu0
        %v668 = vadd.f32 0.0, %v667
        %669 = vdwg.mxu0
        %670 = vmatpush.msra.mxu0 1.0
        %671 = vmatpush.msra.mxu0 1.0
        %672 = vmatpush.msra.mxu0 1.0
        %673 = vmatpush.msra.mxu0 1.0
        %674 = vmatpush.msra.mxu0 1.0
        %675 = vmatpush.msra.mxu0 1.0
        %676 = vmatpush.msra.mxu0 1.0
        %677 = vmatpush.msra.mxu0 1.0
        %678 = vmatpush.msra.mxu0 1.0
        %679 = vmatpush.msra.mxu0 1.0
        %680 = vmatpush.msra.mxu0 1.0
        %681 = vmatpush.msra.mxu0 1.0
        %682 = vmatpush.msra.mxu0 1.0
        %683 = vmatpush.msra.mxu0 1.0
        %684 = vmatpush.msra.mxu0 1.0
        %685 = vmatpush.msra.mxu0 1.0
        %686 = vmatmul.f32.gmra.mxu0 %v647
        %v687 = vpop.f32.mrf.mxu0
        %v688 = vadd.f32 %v668, %v687
        %689 = vdwg.mxu0
        %v690 = vstv %s462
        %692 = vrot.lane.b32.xlu0 %v553, 1
        %v693 = vpop.permute.xlu0 %692
        %696 = vrot.lane.b32.xlu0 %v598, 2
        %v697 = vpop.permute.xlu0 %696
        %700 = vrot.lane.b32.xlu0 %v643, 3
        %v701 = vpop.permute.xlu0 %700
        %704 = vrot.lane.b32.xlu0 %v688, 4
        %v705 = vpop.permute.xlu0 %704
        %vm707 = vcmask 7168
        %v708 = vsel %vm707, %v507, %v693
        %vm709 = vcmask 15360
        %v710 = vsel %vm709, %v708, %v697
        %vm711 = vcmask 23552
        %v712 = vsel %vm711, %v710, %v701
        %vm713 = vcmask 31744
        %v714 = vsel %vm713, %v712, %v705
        %vm715 = vcmask 39936
        %v716 = vsel %vm715, %v714, %v690
        %vm717 = vcmask 44032
        %718 = vst.msk [vmem:[%s223] sm:$0xf] %vm717, %v716
        %s719 = sand.u32 %s100, 1
        %s720 = scalar_lea.sflag [#allocation4], %s719
        %s721 = sand.u32 %s100, 1
        %s722 = smul.addr %s721, 4
        %s723 = scalar_lea.vmem [#allocation7], %s722
        // Predicated region
        $region37: #{tpu_custom_call.1} parent=27 // pred_check
          %p724 = pneg %p110
        $region38: #{tpu_custom_call.1} parent=27 // pred_check_branch
          %726 = sbr.rel (%p724) target = $region40
        $region39: #{tpu_custom_call.1} parent=27 // pred_region
          %728 = vsyncadd %s720, 0
          %s729 = sadd.s32 %s27, %s26
          %s730 = smul.addr %s729, 4
          %s731 = scalar_lea.hbm %s2, %s730
          %s733 = sshll.u32 %s723, 4
          %s734 = int_to_ptr.vmem [resolvable:$true] %s733
          %s735 = sshll.u32 %s731, 4
          %s736 = int_to_ptr.hbm [resolvable:$true] %s735
          %738 = dma.vmem_to_hbm [thread:$0]  %s734, 64, %s736, %s720
        $region40: #{tpu_custom_call.1} parent=27 // pred_fallthru
          _
      $region28: #{tpu_custom_call.1} parent=5 // pred_fallthru
        _
      %p739 = scmp.le.s32.totalorder 2, %s17
      // Predicated region
      $region41: #{tpu_custom_call.1} parent=5 // pred_check
        %p740 = pneg %p739
      $region42: #{tpu_custom_call.1} parent=5 // pred_check_branch
        %742 = sbr.rel (%p740) target = $region44
      $region43: #{tpu_custom_call.1} parent=5 // pred_region
        %s743 = ssub.s32 %s17, 2
        // Predicated region
        $region45: #{tpu_custom_call.1} parent=43 // pred_check
          %p744 = pneg %p116
        $region46: #{tpu_custom_call.1} parent=43 // pred_check_branch
          %746 = sbr.rel (%p744) target = $region48
        $region47: #{tpu_custom_call.1} parent=43 // pred_region
          %s747 = sand.u32 %s101, 1
          %s748 = scalar_lea.sflag [#allocation4], %s747
          %s749 = sand.u32 %s101, 1
          %s750 = smul.addr %s749, 4
          %s751 = scalar_lea.vmem [#allocation7], %s750
          %753 = dma.done %s748, 64
        $region48: #{tpu_custom_call.1} parent=43 // pred_fallthru
          _
      $region44: #{tpu_custom_call.1} parent=5 // pred_fallthru
        _
    $region6: #{tpu_custom_call.1} parent=1 // loop_footer
      %s21 = sadd.s32 1, %s17
    $region7: #{tpu_custom_call.1} parent=1 // loop_footer_branch
      %16 = sbr.rel target = $region3
    $region8: #{tpu_custom_call.1} parent=1 // loop_exit
      _
    %754 = vsyncpa [#allocation3], 1
    %s755 = scalar_lea.sflag [#allocation3], 1
    %756 = vsyncpa %s755, 1
    %757 = vsyncpa [#allocation6], 1
    %s758 = scalar_lea.sflag [#allocation6], 1
    %759 = vsyncpa %s758, 1
    %760 = vsyncpa [#allocation4], 1
    %s761 = scalar_lea.sflag [#allocation4], 1
    %762 = vsyncpa %s761, 1

</llo_original>
